<compile_context>
chip_gen: v7x
topology: tpu7x:2x2x1
jax: 0.10.0
libtpu: 0.0.40
codegen_flags: <defaults>
</compile_context>

<pallas_src>
import functools

import jax
import jax.numpy as jnp
import numpy as np
from jax.experimental import pallas as pl
from jax.experimental.pallas import tpu as pltpu


def _round_up(x, m):
    return ((x + m - 1) // m) * m


def _lstm_kernel(hidden, unroll,
                 x_ref, wih_ref, whh_ref, b_ref, wreg_ref, breg_ref,
                 out_ref, xp_scr):
    """Single invocation: full LSTM over T steps + final regression.

    Packed-gate layout: the 4 gates (i, f, g, o) of width H each occupy lanes
    [g*H, (g+1)*H) of a single lane-aligned block of width G (= round_up(4H,128)).

    x_ref   : (T*BP, D)  inputs, rows ordered (t, b), batch padded to BP
    wih_ref : (D, G)     input->gates weights, packed gate columns
    whh_ref : (G, G)     hidden->gates weights; rows >= H are zero
    b_ref   : (1, G)     combined bias (b_ih + b_hh); lanes >= 4H are zero
    wreg_ref: (G, 1)     regressor weight; rows >= H are zero
    breg_ref: (1, 1)     regressor bias
    out_ref : (BP, 1)    regression output for the last timestep
    xp_scr  : (T*BP, G)  scratch holding the hoisted input projection
    """
    BP = out_ref.shape[0]
    G = whh_ref.shape[1]
    H = hidden
    n_steps = xp_scr.shape[0] // BP

    # Load resident operands once (outside the recurrence).
    wih = wih_ref[...]
    whh = whh_ref[...]
    bias = b_ref[...]                       # (1, G)

    # Hoisted input projection for all timesteps: one MXU matmul.
    xp_scr[...] = (
        jnp.dot(x_ref[...], wih, preferred_element_type=jnp.float32) + bias)

    # Lane masks (built once, hoisted out of the serial loop).
    lane = jax.lax.broadcasted_iota(jnp.int32, (BP, G), 1)
    g_mask = (lane >= 2 * H) & (lane < 3 * H)   # cell-gate lanes -> tanh
    valid = lane < H                            # real hidden lanes

    h0 = jnp.zeros((BP, G), jnp.float32)
    c0 = jnp.zeros((BP, G), jnp.float32)

    def step(t, carry):
        h, c = carry
        start = pl.multiple_of(t * BP, BP)             # sublane-aligned slice
        xp_t = xp_scr[pl.ds(start, BP), :]             # (BP, G)
        # Single MXU output tile per step (packed gates).
        gates = xp_t + jnp.dot(h, whh, preferred_element_type=jnp.float32)
        # One full-vreg sigmoid + one full-vreg tanh, lane-select the cell gate.
        act = jnp.where(g_mask, jnp.tanh(gates), jax.nn.sigmoid(gates))
        # Re-align f/g/o onto lanes [0, H) (where c/h live) via XLU rotates.
        i_al = act                                     # i already at lanes [0, H)
        f_al = pltpu.roll(act, G - H, axis=1)
        g_al = pltpu.roll(act, G - 2 * H, axis=1)
        o_al = pltpu.roll(act, G - 3 * H, axis=1)
        # Mask keeps padded lanes of c (and hence h) exactly zero.
        c_new = jnp.where(valid, f_al * c + i_al * g_al, 0.0)
        h_new = o_al * jnp.tanh(c_new)                 # padded lanes: x * tanh(0) = 0
        return h_new, c_new

    h_last, _ = jax.lax.fori_loop(0, n_steps, step, (h0, c0), unroll=unroll)

    # Regression on the last hidden state (padded lanes of h are exactly zero,
    # and wreg rows >= H are zero).
    y = (jnp.dot(h_last, wreg_ref[...], preferred_element_type=jnp.float32)
         + breg_ref[...])
    out_ref[...] = y.astype(out_ref.dtype)


def lstm_regression_pallas(x, w_ih, w_hh, b_ih, b_hh, w_reg, b_reg):
    """x: (B, T, D) float32. Returns (B, 1) float32."""
    B, T, D = x.shape
    H4, _ = w_ih.shape
    H = H4 // 4

    G = _round_up(4 * H, 128)       # packed gate width (4*H=128 for H=32)
    BP = _round_up(B, 8)            # sublane-padded batch
    f32 = jnp.float32

    # Batch-pad and flatten x to (T*BP, D), rows ordered (t, b).
    x_pad = jnp.zeros((BP, T, D), f32).at[:B].set(x.astype(f32))
    x_flat = jnp.transpose(x_pad, (1, 0, 2)).reshape(T * BP, D)

    # Packed-gate, lane-aligned zero-padded weights.  PyTorch stores gates as
    # [i; f; g; o] rows, so transposing gives the packed column layout directly.
    wih_pad = jnp.zeros((D, G), f32).at[:, :4 * H].set(w_ih.T.astype(f32))
    whh_pad = jnp.zeros((G, G), f32).at[:H, :4 * H].set(w_hh.T.astype(f32))
    b_pad = jnp.zeros((1, G), f32).at[0, :4 * H].set((b_ih + b_hh).astype(f32))

    wreg_pad = jnp.zeros((G, 1), f32).at[:H, :].set(w_reg.T.astype(f32))
    breg = b_reg.reshape(1, 1).astype(f32)

    unroll = max(1, min(T, 8))      # capped unroll: full at tiny T, bounded at large T

    grid_spec = pltpu.PrefetchScalarGridSpec(
        num_scalar_prefetch=0,
        grid=(1,),                                     # single invocation
        in_specs=[
            pl.BlockSpec((T * BP, D), lambda i: (0, 0)),   # x (all timesteps)
            pl.BlockSpec((D, G), lambda i: (0, 0)),        # W_ih^T (packed)
            pl.BlockSpec((G, G), lambda i: (0, 0)),        # W_hh^T (packed)
            pl.BlockSpec((1, G), lambda i: (0, 0)),        # bias
            pl.BlockSpec((G, 1), lambda i: (0, 0)),        # regressor weight^T
            pl.BlockSpec((1, 1), lambda i: (0, 0)),        # regressor bias
        ],
        out_specs=pl.BlockSpec((BP, 1), lambda i: (0, 0)),
        scratch_shapes=[
            pltpu.VMEM((T * BP, G), jnp.float32),          # hoisted x-projection
        ],
    )

    out_pad = pl.pallas_call(
        functools.partial(_lstm_kernel, H, unroll),
        out_shape=jax.ShapeDtypeStruct((BP, 1), jnp.float32),
        grid_spec=grid_spec,
        compiler_params=pltpu.CompilerParams(
            dimension_semantics=("arbitrary",)),
    )(x_flat, wih_pad, whh_pad, b_pad, wreg_pad, breg)

    return out_pad[:B]


def lstm_regression_ref(x, w_ih, w_hh, b_ih, b_hh, w_reg, b_reg):
    """Pure-JAX reference matching torch.nn.LSTM (1 layer, batch_first) + Linear."""
    B, T, D = x.shape
    H = w_hh.shape[1]

    def step(carry, x_t):
        h, c = carry
        gates = x_t @ w_ih.T + b_ih + h @ w_hh.T + b_hh
        i = jax.nn.sigmoid(gates[:, 0 * H:1 * H])
        f = jax.nn.sigmoid(gates[:, 1 * H:2 * H])
        g = jnp.tanh(gates[:, 2 * H:3 * H])
        o = jax.nn.sigmoid(gates[:, 3 * H:4 * H])
        c = f * c + i * g
        h = o * jnp.tanh(c)
        return (h, c), h

    h0 = jnp.zeros((B, H), jnp.float32)
    c0 = jnp.zeros((B, H), jnp.float32)
    (h_last, _), _ = jax.lax.scan(step, (h0, c0), jnp.transpose(x, (1, 0, 2)))
    return h_last @ w_reg.T + b_reg


if __name__ == "__main__":
    # Module hyperparameters (small, consistent with the forward pass)
    input_size, n_hidden, n_layers = 4, 32, 1
    B, T = 2, 8

    key = jax.random.PRNGKey(0)
    k_x, k1, k2, k3, k4, k5, k6 = jax.random.split(key, 7)

    # Deterministic parameter init (PyTorch-style uniform(-1/sqrt(H), 1/sqrt(H)))
    bound = 1.0 / np.sqrt(n_hidden)
    w_ih = jax.random.uniform(k1, (4 * n_hidden, input_size), jnp.float32, -bound, bound)
    w_hh = jax.random.uniform(k2, (4 * n_hidden, n_hidden), jnp.float32, -bound, bound)
    b_ih = jax.random.uniform(k3, (4 * n_hidden,), jnp.float32, -bound, bound)
    b_hh = jax.random.uniform(k4, (4 * n_hidden,), jnp.float32, -bound, bound)
    w_reg = jax.random.uniform(k5, (1, n_hidden), jnp.float32, -bound, bound)
    b_reg = jax.random.uniform(k6, (1,), jnp.float32, -bound, bound)

    x = jax.random.normal(k_x, (B, T, input_size), jnp.float32)

    out = lstm_regression_pallas(x, w_ih, w_hh, b_ih, b_hh, w_reg, b_reg)
    out = jax.block_until_ready(out)

    ref = lstm_regression_ref(x, w_ih, w_hh, b_ih, b_hh, w_reg, b_reg)
    np.testing.assert_allclose(np.asarray(out), np.asarray(ref), rtol=1e-5, atol=1e-5)

    assert out.shape == (B, 1)
    print("KERNEL_OK")
</pallas_src>

<mosaic_0001>
module attributes {stable_mosaic.version = 11 : i64} {
  func.func @_lstm_kernel(%arg0: i32, %arg1: memref<64x4xf32, #tpu.memory_space<vmem>>, %arg2: memref<4x128xf32, #tpu.memory_space<vmem>>, %arg3: memref<128x128xf32, #tpu.memory_space<vmem>>, %arg4: memref<1x128xf32, #tpu.memory_space<vmem>>, %arg5: memref<128x1xf32, #tpu.memory_space<vmem>>, %arg6: memref<1x1xf32, #tpu.memory_space<vmem>>, %arg7: memref<8x1xf32, #tpu.memory_space<vmem>>, %arg8: memref<64x128xf32, #tpu.memory_space<vmem>>) attributes {dimension_semantics = [#tpu.dimension_semantics<arbitrary>], iteration_bounds = array<i64: 1>, scalar_prefetch = 0 : i64, scratch_operands = 1 : i64, tpu.core_type = #tpu.core_type<tc>, window_params = [{pipeline_mode = #tpu.pipeline_mode<synchronous>, transform_indices = @transform_0, window_bounds = array<i64: 64, 4>}, {pipeline_mode = #tpu.pipeline_mode<synchronous>, transform_indices = @transform_1, window_bounds = array<i64: 4, 128>}, {pipeline_mode = #tpu.pipeline_mode<synchronous>, transform_indices = @transform_2, window_bounds = array<i64: 128, 128>}, {pipeline_mode = #tpu.pipeline_mode<synchronous>, transform_indices = @transform_3, window_bounds = array<i64: 1, 128>}, {pipeline_mode = #tpu.pipeline_mode<synchronous>, transform_indices = @transform_4, window_bounds = array<i64: 128, 1>}, {pipeline_mode = #tpu.pipeline_mode<synchronous>, transform_indices = @transform_5, window_bounds = array<i64: 1, 1>}, {pipeline_mode = #tpu.pipeline_mode<synchronous>, transform_indices = @transform_6, window_bounds = array<i64: 8, 1>}]} {
    %c0 = arith.constant 0 : index
    %c0_0 = arith.constant 0 : index
    %0 = vector.load %arg2[%c0, %c0_0] : memref<4x128xf32, #tpu.memory_space<vmem>>, vector<4x128xf32>
    %c0_1 = arith.constant 0 : index
    %c0_2 = arith.constant 0 : index
    %1 = vector.load %arg3[%c0_1, %c0_2] : memref<128x128xf32, #tpu.memory_space<vmem>>, vector<128x128xf32>
    %c0_3 = arith.constant 0 : index
    %c0_4 = arith.constant 0 : index
    %2 = vector.load %arg4[%c0_3, %c0_4] : memref<1x128xf32, #tpu.memory_space<vmem>>, vector<1x128xf32>
    %c0_5 = arith.constant 0 : index
    %c0_6 = arith.constant 0 : index
    %3 = vector.load %arg1[%c0_5, %c0_6] : memref<64x4xf32, #tpu.memory_space<vmem>>, vector<64x4xf32>
    %cst = arith.constant dense<0.000000e+00> : vector<64x128xf32>
    %4 = tpu.matmul %3, %0, %cst {dimension_numbers = #tpu.dot_dimension_numbers<[1], [0], [0], [1], [0, 0, 1, 1], [], []>} : vector<64x4xf32>, vector<4x128xf32>, vector<64x128xf32> -> vector<64x128xf32>
    %5 = vector.broadcast %2 : vector<1x128xf32> to vector<64x128xf32>
    %6 = arith.addf %4, %5 : vector<64x128xf32>
    %c0_7 = arith.constant 0 : index
    %c0_8 = arith.constant 0 : index
    %7 = vector.load %arg8[%c0_7, %c0_8] : memref<64x128xf32, #tpu.memory_space<vmem>>, vector<64x128xf32>
    tpu.vector_store %arg8[%c0_7, %c0_8], %6 {strides = array<i32>} : memref<64x128xf32, #tpu.memory_space<vmem>>, vector<64x128xf32>,
    %8 = tpu.iota {dimensions = array<i32: 1>} : vector<8x128xi32>
    %c64_i32 = arith.constant 64 : i32
    %9 = vector.broadcast %c64_i32 : i32 to vector<8x128xi32>
    %10 = arith.cmpi sge, %8, %9 : vector<8x128xi32>
    %c96_i32 = arith.constant 96 : i32
    %11 = vector.broadcast %c96_i32 : i32 to vector<8x128xi32>
    %12 = arith.cmpi slt, %8, %11 : vector<8x128xi32>
    %13 = arith.andi %10, %12 : vector<8x128xi1>
    %c32_i32 = arith.constant 32 : i32
    %14 = vector.broadcast %c32_i32 : i32 to vector<8x128xi32>
    %15 = arith.cmpi slt, %8, %14 : vector<8x128xi32>
    %cst_9 = arith.constant 0.000000e+00 : f32
    %16 = vector.broadcast %cst_9 : f32 to vector<8x128xf32>
    %cst_10 = arith.constant 0.000000e+00 : f32
    %17 = vector.broadcast %cst_10 : f32 to vector<8x128xf32>
    %c0_i32 = arith.constant 0 : i32
    %c8_i32 = arith.constant 8 : i32
    %18 = arith.muli %c0_i32, %c8_i32 : i32
    %19 = tpu.assume_multiple %18, 8 : i32
    %20 = arith.index_cast %19 : i32 to index
    %c0_11 = arith.constant 0 : index
    %21 = vector.load %arg8[%20, %c0_11] : memref<64x128xf32, #tpu.memory_space<vmem>>, vector<8x128xf32>
    %cst_12 = arith.constant dense<0.000000e+00> : vector<8x128xf32>
    %22 = tpu.matmul %16, %1, %cst_12 {dimension_numbers = #tpu.dot_dimension_numbers<[1], [0], [0], [1], [0, 0, 1, 1], [], []>} : vector<8x128xf32>, vector<128x128xf32>, vector<8x128xf32> -> vector<8x128xf32>
    %23 = arith.addf %21, %22 : vector<8x128xf32>
    %24 = math.tanh %23 : vector<8x128xf32>
    %25 = arith.negf %23 : vector<8x128xf32>
    %26 = math.exp %25 : vector<8x128xf32>
    %cst_13 = arith.constant 1.000000e+00 : f32
    %27 = vector.broadcast %cst_13 : f32 to vector<8x128xf32>
    %28 = arith.addf %27, %26 : vector<8x128xf32>
    %29 = arith.divf %27, %28 : vector<8x128xf32>
    %30 = arith.select %13, %24, %29 : vector<8x128xi1>, vector<8x128xf32>
    %c96_i32_14 = arith.constant 96 : i32
    %31 = tpu.dynamic_rotate %30 by %c96_i32_14 dim 1 : vector<8x128xf32>, i32 -> vector<8x128xf32>
    %c64_i32_15 = arith.constant 64 : i32
    %32 = tpu.dynamic_rotate %30 by %c64_i32_15 dim 1 : vector<8x128xf32>, i32 -> vector<8x128xf32>
    %c32_i32_16 = arith.constant 32 : i32
    %33 = tpu.dynamic_rotate %30 by %c32_i32_16 dim 1 : vector<8x128xf32>, i32 -> vector<8x128xf32>
    %34 = arith.mulf %31, %17 : vector<8x128xf32>
    %35 = arith.mulf %30, %32 : vector<8x128xf32>
    %36 = arith.addf %34, %35 : vector<8x128xf32>
    %cst_17 = arith.constant 0.000000e+00 : f32
    %37 = vector.broadcast %cst_17 : f32 to vector<8x128xf32>
    %38 = arith.select %15, %36, %37 : vector<8x128xi1>, vector<8x128xf32>
    %39 = math.tanh %38 : vector<8x128xf32>
    %40 = arith.mulf %33, %39 : vector<8x128xf32>
    %c1_i32 = arith.constant 1 : i32
    %c8_i32_18 = arith.constant 8 : i32
    %41 = arith.muli %c1_i32, %c8_i32_18 : i32
    %42 = tpu.assume_multiple %41, 8 : i32
    %43 = arith.index_cast %42 : i32 to index
    %c0_19 = arith.constant 0 : index
    %44 = vector.load %arg8[%43, %c0_19] : memref<64x128xf32, #tpu.memory_space<vmem>>, vector<8x128xf32>
    %cst_20 = arith.constant dense<0.000000e+00> : vector<8x128xf32>
    %45 = tpu.matmul %40, %1, %cst_20 {dimension_numbers = #tpu.dot_dimension_numbers<[1], [0], [0], [1], [0, 0, 1, 1], [], []>} : vector<8x128xf32>, vector<128x128xf32>, vector<8x128xf32> -> vector<8x128xf32>
    %46 = arith.addf %44, %45 : vector<8x128xf32>
    %47 = math.tanh %46 : vector<8x128xf32>
    %48 = arith.negf %46 : vector<8x128xf32>
    %49 = math.exp %48 : vector<8x128xf32>
    %cst_21 = arith.constant 1.000000e+00 : f32
    %50 = vector.broadcast %cst_21 : f32 to vector<8x128xf32>
    %51 = arith.addf %50, %49 : vector<8x128xf32>
    %52 = arith.divf %50, %51 : vector<8x128xf32>
    %53 = arith.select %13, %47, %52 : vector<8x128xi1>, vector<8x128xf32>
    %c96_i32_22 = arith.constant 96 : i32
    %54 = tpu.dynamic_rotate %53 by %c96_i32_22 dim 1 : vector<8x128xf32>, i32 -> vector<8x128xf32>
    %c64_i32_23 = arith.constant 64 : i32
    %55 = tpu.dynamic_rotate %53 by %c64_i32_23 dim 1 : vector<8x128xf32>, i32 -> vector<8x128xf32>
    %c32_i32_24 = arith.constant 32 : i32
    %56 = tpu.dynamic_rotate %53 by %c32_i32_24 dim 1 : vector<8x128xf32>, i32 -> vector<8x128xf32>
    %57 = arith.mulf %54, %38 : vector<8x128xf32>
    %58 = arith.mulf %53, %55 : vector<8x128xf32>
    %59 = arith.addf %57, %58 : vector<8x128xf32>
    %cst_25 = arith.constant 0.000000e+00 : f32
    %60 = vector.broadcast %cst_25 : f32 to vector<8x128xf32>
    %61 = arith.select %15, %59, %60 : vector<8x128xi1>, vector<8x128xf32>
    %62 = math.tanh %61 : vector<8x128xf32>
    %63 = arith.mulf %56, %62 : vector<8x128xf32>
    %c2_i32 = arith.constant 2 : i32
    %c8_i32_26 = arith.constant 8 : i32
    %64 = arith.muli %c2_i32, %c8_i32_26 : i32
    %65 = tpu.assume_multiple %64, 8 : i32
    %66 = arith.index_cast %65 : i32 to index
    %c0_27 = arith.constant 0 : index
    %67 = vector.load %arg8[%66, %c0_27] : memref<64x128xf32, #tpu.memory_space<vmem>>, vector<8x128xf32>
    %cst_28 = arith.constant dense<0.000000e+00> : vector<8x128xf32>
    %68 = tpu.matmul %63, %1, %cst_28 {dimension_numbers = #tpu.dot_dimension_numbers<[1], [0], [0], [1], [0, 0, 1, 1], [], []>} : vector<8x128xf32>, vector<128x128xf32>, vector<8x128xf32> -> vector<8x128xf32>
    %69 = arith.addf %67, %68 : vector<8x128xf32>
    %70 = math.tanh %69 : vector<8x128xf32>
    %71 = arith.negf %69 : vector<8x128xf32>
    %72 = math.exp %71 : vector<8x128xf32>
    %cst_29 = arith.constant 1.000000e+00 : f32
    %73 = vector.broadcast %cst_29 : f32 to vector<8x128xf32>
    %74 = arith.addf %73, %72 : vector<8x128xf32>
    %75 = arith.divf %73, %74 : vector<8x128xf32>
    %76 = arith.select %13, %70, %75 : vector<8x128xi1>, vector<8x128xf32>
    %c96_i32_30 = arith.constant 96 : i32
    %77 = tpu.dynamic_rotate %76 by %c96_i32_30 dim 1 : vector<8x128xf32>, i32 -> vector<8x128xf32>
    %c64_i32_31 = arith.constant 64 : i32
    %78 = tpu.dynamic_rotate %76 by %c64_i32_31 dim 1 : vector<8x128xf32>, i32 -> vector<8x128xf32>
    %c32_i32_32 = arith.constant 32 : i32
    %79 = tpu.dynamic_rotate %76 by %c32_i32_32 dim 1 : vector<8x128xf32>, i32 -> vector<8x128xf32>
    %80 = arith.mulf %77, %61 : vector<8x128xf32>
    %81 = arith.mulf %76, %78 : vector<8x128xf32>
    %82 = arith.addf %80, %81 : vector<8x128xf32>
    %cst_33 = arith.constant 0.000000e+00 : f32
    %83 = vector.broadcast %cst_33 : f32 to vector<8x128xf32>
    %84 = arith.select %15, %82, %83 : vector<8x128xi1>, vector<8x128xf32>
    %85 = math.tanh %84 : vector<8x128xf32>
    %86 = arith.mulf %79, %85 : vector<8x128xf32>
    %c3_i32 = arith.constant 3 : i32
    %c8_i32_34 = arith.constant 8 : i32
    %87 = arith.muli %c3_i32, %c8_i32_34 : i32
    %88 = tpu.assume_multiple %87, 8 : i32
    %89 = arith.index_cast %88 : i32 to index
    %c0_35 = arith.constant 0 : index
    %90 = vector.load %arg8[%89, %c0_35] : memref<64x128xf32, #tpu.memory_space<vmem>>, vector<8x128xf32>
    %cst_36 = arith.constant dense<0.000000e+00> : vector<8x128xf32>
    %91 = tpu.matmul %86, %1, %cst_36 {dimension_numbers = #tpu.dot_dimension_numbers<[1], [0], [0], [1], [0, 0, 1, 1], [], []>} : vector<8x128xf32>, vector<128x128xf32>, vector<8x128xf32> -> vector<8x128xf32>
    %92 = arith.addf %90, %91 : vector<8x128xf32>
    %93 = math.tanh %92 : vector<8x128xf32>
    %94 = arith.negf %92 : vector<8x128xf32>
    %95 = math.exp %94 : vector<8x128xf32>
    %cst_37 = arith.constant 1.000000e+00 : f32
    %96 = vector.broadcast %cst_37 : f32 to vector<8x128xf32>
    %97 = arith.addf %96, %95 : vector<8x128xf32>
    %98 = arith.divf %96, %97 : vector<8x128xf32>
    %99 = arith.select %13, %93, %98 : vector<8x128xi1>, vector<8x128xf32>
    %c96_i32_38 = arith.constant 96 : i32
    %100 = tpu.dynamic_rotate %99 by %c96_i32_38 dim 1 : vector<8x128xf32>, i32 -> vector<8x128xf32>
    %c64_i32_39 = arith.constant 64 : i32
    %101 = tpu.dynamic_rotate %99 by %c64_i32_39 dim 1 : vector<8x128xf32>, i32 -> vector<8x128xf32>
    %c32_i32_40 = arith.constant 32 : i32
    %102 = tpu.dynamic_rotate %99 by %c32_i32_40 dim 1 : vector<8x128xf32>, i32 -> vector<8x128xf32>
    %103 = arith.mulf %100, %84 : vector<8x128xf32>
    %104 = arith.mulf %99, %101 : vector<8x128xf32>
    %105 = arith.addf %103, %104 : vector<8x128xf32>
    %cst_41 = arith.constant 0.000000e+00 : f32
    %106 = vector.broadcast %cst_41 : f32 to vector<8x128xf32>
    %107 = arith.select %15, %105, %106 : vector<8x128xi1>, vector<8x128xf32>
    %108 = math.tanh %107 : vector<8x128xf32>
    %109 = arith.mulf %102, %108 : vector<8x128xf32>
    %c4_i32 = arith.constant 4 : i32
    %c8_i32_42 = arith.constant 8 : i32
    %110 = arith.muli %c4_i32, %c8_i32_42 : i32
    %111 = tpu.assume_multiple %110, 8 : i32
    %112 = arith.index_cast %111 : i32 to index
    %c0_43 = arith.constant 0 : index
    %113 = vector.load %arg8[%112, %c0_43] : memref<64x128xf32, #tpu.memory_space<vmem>>, vector<8x128xf32>
    %cst_44 = arith.constant dense<0.000000e+00> : vector<8x128xf32>
    %114 = tpu.matmul %109, %1, %cst_44 {dimension_numbers = #tpu.dot_dimension_numbers<[1], [0], [0], [1], [0, 0, 1, 1], [], []>} : vector<8x128xf32>, vector<128x128xf32>, vector<8x128xf32> -> vector<8x128xf32>
    %115 = arith.addf %113, %114 : vector<8x128xf32>
    %116 = math.tanh %115 : vector<8x128xf32>
    %117 = arith.negf %115 : vector<8x128xf32>
    %118 = math.exp %117 : vector<8x128xf32>
    %cst_45 = arith.constant 1.000000e+00 : f32
    %119 = vector.broadcast %cst_45 : f32 to vector<8x128xf32>
    %120 = arith.addf %119, %118 : vector<8x128xf32>
    %121 = arith.divf %119, %120 : vector<8x128xf32>
    %122 = arith.select %13, %116, %121 : vector<8x128xi1>, vector<8x128xf32>
    %c96_i32_46 = arith.constant 96 : i32
    %123 = tpu.dynamic_rotate %122 by %c96_i32_46 dim 1 : vector<8x128xf32>, i32 -> vector<8x128xf32>
    %c64_i32_47 = arith.constant 64 : i32
    %124 = tpu.dynamic_rotate %122 by %c64_i32_47 dim 1 : vector<8x128xf32>, i32 -> vector<8x128xf32>
    %c32_i32_48 = arith.constant 32 : i32
    %125 = tpu.dynamic_rotate %122 by %c32_i32_48 dim 1 : vector<8x128xf32>, i32 -> vector<8x128xf32>
    %126 = arith.mulf %123, %107 : vector<8x128xf32>
    %127 = arith.mulf %122, %124 : vector<8x128xf32>
    %128 = arith.addf %126, %127 : vector<8x128xf32>
    %cst_49 = arith.constant 0.000000e+00 : f32
    %129 = vector.broadcast %cst_49 : f32 to vector<8x128xf32>
    %130 = arith.select %15, %128, %129 : vector<8x128xi1>, vector<8x128xf32>
    %131 = math.tanh %130 : vector<8x128xf32>
    %132 = arith.mulf %125, %131 : vector<8x128xf32>
    %c5_i32 = arith.constant 5 : i32
    %c8_i32_50 = arith.constant 8 : i32
    %133 = arith.muli %c5_i32, %c8_i32_50 : i32
    %134 = tpu.assume_multiple %133, 8 : i32
    %135 = arith.index_cast %134 : i32 to index
    %c0_51 = arith.constant 0 : index
    %136 = vector.load %arg8[%135, %c0_51] : memref<64x128xf32, #tpu.memory_space<vmem>>, vector<8x128xf32>
    %cst_52 = arith.constant dense<0.000000e+00> : vector<8x128xf32>
    %137 = tpu.matmul %132, %1, %cst_52 {dimension_numbers = #tpu.dot_dimension_numbers<[1], [0], [0], [1], [0, 0, 1, 1], [], []>} : vector<8x128xf32>, vector<128x128xf32>, vector<8x128xf32> -> vector<8x128xf32>
    %138 = arith.addf %136, %137 : vector<8x128xf32>
    %139 = math.tanh %138 : vector<8x128xf32>
    %140 = arith.negf %138 : vector<8x128xf32>
    %141 = math.exp %140 : vector<8x128xf32>
    %cst_53 = arith.constant 1.000000e+00 : f32
    %142 = vector.broadcast %cst_53 : f32 to vector<8x128xf32>
    %143 = arith.addf %142, %141 : vector<8x128xf32>
    %144 = arith.divf %142, %143 : vector<8x128xf32>
    %145 = arith.select %13, %139, %144 : vector<8x128xi1>, vector<8x128xf32>
    %c96_i32_54 = arith.constant 96 : i32
    %146 = tpu.dynamic_rotate %145 by %c96_i32_54 dim 1 : vector<8x128xf32>, i32 -> vector<8x128xf32>
    %c64_i32_55 = arith.constant 64 : i32
    %147 = tpu.dynamic_rotate %145 by %c64_i32_55 dim 1 : vector<8x128xf32>, i32 -> vector<8x128xf32>
    %c32_i32_56 = arith.constant 32 : i32
    %148 = tpu.dynamic_rotate %145 by %c32_i32_56 dim 1 : vector<8x128xf32>, i32 -> vector<8x128xf32>
    %149 = arith.mulf %146, %130 : vector<8x128xf32>
    %150 = arith.mulf %145, %147 : vector<8x128xf32>
    %151 = arith.addf %149, %150 : vector<8x128xf32>
    %cst_57 = arith.constant 0.000000e+00 : f32
    %152 = vector.broadcast %cst_57 : f32 to vector<8x128xf32>
    %153 = arith.select %15, %151, %152 : vector<8x128xi1>, vector<8x128xf32>
    %154 = math.tanh %153 : vector<8x128xf32>
    %155 = arith.mulf %148, %154 : vector<8x128xf32>
    %c6_i32 = arith.constant 6 : i32
    %c8_i32_58 = arith.constant 8 : i32
    %156 = arith.muli %c6_i32, %c8_i32_58 : i32
    %157 = tpu.assume_multiple %156, 8 : i32
    %158 = arith.index_cast %157 : i32 to index
    %c0_59 = arith.constant 0 : index
    %159 = vector.load %arg8[%158, %c0_59] : memref<64x128xf32, #tpu.memory_space<vmem>>, vector<8x128xf32>
    %cst_60 = arith.constant dense<0.000000e+00> : vector<8x128xf32>
    %160 = tpu.matmul %155, %1, %cst_60 {dimension_numbers = #tpu.dot_dimension_numbers<[1], [0], [0], [1], [0, 0, 1, 1], [], []>} : vector<8x128xf32>, vector<128x128xf32>, vector<8x128xf32> -> vector<8x128xf32>
    %161 = arith.addf %159, %160 : vector<8x128xf32>
    %162 = math.tanh %161 : vector<8x128xf32>
    %163 = arith.negf %161 : vector<8x128xf32>
    %164 = math.exp %163 : vector<8x128xf32>
    %cst_61 = arith.constant 1.000000e+00 : f32
    %165 = vector.broadcast %cst_61 : f32 to vector<8x128xf32>
    %166 = arith.addf %165, %164 : vector<8x128xf32>
    %167 = arith.divf %165, %166 : vector<8x128xf32>
    %168 = arith.select %13, %162, %167 : vector<8x128xi1>, vector<8x128xf32>
    %c96_i32_62 = arith.constant 96 : i32
    %169 = tpu.dynamic_rotate %168 by %c96_i32_62 dim 1 : vector<8x128xf32>, i32 -> vector<8x128xf32>
    %c64_i32_63 = arith.constant 64 : i32
    %170 = tpu.dynamic_rotate %168 by %c64_i32_63 dim 1 : vector<8x128xf32>, i32 -> vector<8x128xf32>
    %c32_i32_64 = arith.constant 32 : i32
    %171 = tpu.dynamic_rotate %168 by %c32_i32_64 dim 1 : vector<8x128xf32>, i32 -> vector<8x128xf32>
    %172 = arith.mulf %169, %153 : vector<8x128xf32>
    %173 = arith.mulf %168, %170 : vector<8x128xf32>
    %174 = arith.addf %172, %173 : vector<8x128xf32>
    %cst_65 = arith.constant 0.000000e+00 : f32
    %175 = vector.broadcast %cst_65 : f32 to vector<8x128xf32>
    %176 = arith.select %15, %174, %175 : vector<8x128xi1>, vector<8x128xf32>
    %177 = math.tanh %176 : vector<8x128xf32>
    %178 = arith.mulf %171, %177 : vector<8x128xf32>
    %c7_i32 = arith.constant 7 : i32
    %c8_i32_66 = arith.constant 8 : i32
    %179 = arith.muli %c7_i32, %c8_i32_66 : i32
    %180 = tpu.assume_multiple %179, 8 : i32
    %181 = arith.index_cast %180 : i32 to index
    %c0_67 = arith.constant 0 : index
    %182 = vector.load %arg8[%181, %c0_67] : memref<64x128xf32, #tpu.memory_space<vmem>>, vector<8x128xf32>
    %cst_68 = arith.constant dense<0.000000e+00> : vector<8x128xf32>
    %183 = tpu.matmul %178, %1, %cst_68 {dimension_numbers = #tpu.dot_dimension_numbers<[1], [0], [0], [1], [0, 0, 1, 1], [], []>} : vector<8x128xf32>, vector<128x128xf32>, vector<8x128xf32> -> vector<8x128xf32>
    %184 = arith.addf %182, %183 : vector<8x128xf32>
    %185 = math.tanh %184 : vector<8x128xf32>
    %186 = arith.negf %184 : vector<8x128xf32>
    %187 = math.exp %186 : vector<8x128xf32>
    %cst_69 = arith.constant 1.000000e+00 : f32
    %188 = vector.broadcast %cst_69 : f32 to vector<8x128xf32>
    %189 = arith.addf %188, %187 : vector<8x128xf32>
    %190 = arith.divf %188, %189 : vector<8x128xf32>
    %191 = arith.select %13, %185, %190 : vector<8x128xi1>, vector<8x128xf32>
    %c96_i32_70 = arith.constant 96 : i32
    %192 = tpu.dynamic_rotate %191 by %c96_i32_70 dim 1 : vector<8x128xf32>, i32 -> vector<8x128xf32>
    %c64_i32_71 = arith.constant 64 : i32
    %193 = tpu.dynamic_rotate %191 by %c64_i32_71 dim 1 : vector<8x128xf32>, i32 -> vector<8x128xf32>
    %c32_i32_72 = arith.constant 32 : i32
    %194 = tpu.dynamic_rotate %191 by %c32_i32_72 dim 1 : vector<8x128xf32>, i32 -> vector<8x128xf32>
    %195 = arith.mulf %192, %176 : vector<8x128xf32>
    %196 = arith.mulf %191, %193 : vector<8x128xf32>
    %197 = arith.addf %195, %196 : vector<8x128xf32>
    %cst_73 = arith.constant 0.000000e+00 : f32
    %198 = vector.broadcast %cst_73 : f32 to vector<8x128xf32>
    %199 = arith.select %15, %197, %198 : vector<8x128xi1>, vector<8x128xf32>
    %200 = math.tanh %199 : vector<8x128xf32>
    %201 = arith.mulf %194, %200 : vector<8x128xf32>
    %c8_i32_74 = arith.constant 8 : i32
    %c0_75 = arith.constant 0 : index
    %c0_76 = arith.constant 0 : index
    %202 = vector.load %arg5[%c0_75, %c0_76] : memref<128x1xf32, #tpu.memory_space<vmem>>, vector<128x1xf32>
    %cst_77 = arith.constant dense<0.000000e+00> : vector<8x1xf32>
    %203 = tpu.matmul %201, %202, %cst_77 {dimension_numbers = #tpu.dot_dimension_numbers<[1], [0], [0], [1], [0, 0, 1, 1], [], []>} : vector<8x128xf32>, vector<128x1xf32>, vector<8x1xf32> -> vector<8x1xf32>
    %c0_78 = arith.constant 0 : index
    %c0_79 = arith.constant 0 : index
    %204 = vector.load %arg6[%c0_78, %c0_79] : memref<1x1xf32, #tpu.memory_space<vmem>>, vector<1x1xf32>
    %205 = vector.broadcast %204 : vector<1x1xf32> to vector<8x1xf32>
    %206 = arith.addf %203, %205 : vector<8x1xf32>
    %c0_80 = arith.constant 0 : index
    %c0_81 = arith.constant 0 : index
    %207 = vector.load %arg7[%c0_80, %c0_81] : memref<8x1xf32, #tpu.memory_space<vmem>>, vector<8x1xf32>
    tpu.vector_store %arg7[%c0_80, %c0_81], %206 {strides = array<i32>} : memref<8x1xf32, #tpu.memory_space<vmem>>, vector<8x1xf32>,
    return
  }
  func.func @transform_0(%arg0: i32) -> (i32, i32) {
    %c0_i32 = arith.constant 0 : i32
    %c0_i32_0 = arith.constant 0 : i32
    %c0_i32_1 = arith.constant 0 : i32
    return %c0_i32, %c0_i32_0 : i32, i32
  }
  func.func @transform_1(%arg0: i32) -> (i32, i32) {
    %c0_i32 = arith.constant 0 : i32
    %c0_i32_0 = arith.constant 0 : i32
    %c0_i32_1 = arith.constant 0 : i32
    return %c0_i32, %c0_i32_0 : i32, i32
  }
  func.func @transform_2(%arg0: i32) -> (i32, i32) {
    %c0_i32 = arith.constant 0 : i32
    %c0_i32_0 = arith.constant 0 : i32
    %c0_i32_1 = arith.constant 0 : i32
    return %c0_i32, %c0_i32_0 : i32, i32
  }
  func.func @transform_3(%arg0: i32) -> (i32, i32) {
    %c0_i32 = arith.constant 0 : i32
    %c0_i32_0 = arith.constant 0 : i32
    %c0_i32_1 = arith.constant 0 : i32
    return %c0_i32, %c0_i32_0 : i32, i32
  }
  func.func @transform_4(%arg0: i32) -> (i32, i32) {
    %c0_i32 = arith.constant 0 : i32
    %c0_i32_0 = arith.constant 0 : i32
    %c0_i32_1 = arith.constant 0 : i32
    return %c0_i32, %c0_i32_0 : i32, i32
  }
  func.func @transform_5(%arg0: i32) -> (i32, i32) {
    %c0_i32 = arith.constant 0 : i32
    %c0_i32_0 = arith.constant 0 : i32
    %c0_i32_1 = arith.constant 0 : i32
    return %c0_i32, %c0_i32_0 : i32, i32
  }
  func.func @transform_6(%arg0: i32) -> (i32, i32) {
    %c0_i32 = arith.constant 0 : i32
    %c0_i32_0 = arith.constant 0 : i32
    %c0_i32_1 = arith.constant 0 : i32
    return %c0_i32, %c0_i32_0 : i32, i32
  }
}

</mosaic_0001>

<llo_original>
// kernel: tpu_custom_call.1
$region0: #{tpu_custom_call.1}
  #allocation0 [shape = 'u32[]', space=smem, size = 0x4, offset = 0x4, fixed_abs, tag = 'smem constant byte address 0x4 - core index']
  #allocation1 [shape = 'u32[144,128]{1,0:T(1,128)}', space=vmem, size = 0x12000, scoped, tag = 'internal scratch']
  #allocation2 [shape = 'f32[64,128]{1,0:T(8,128)}', space=vmem, size = 0x8000, scoped, tag = 'scratch operand']
  #allocation3 [shape = 'f32[1,1]{1,0:T(1,128)S(1)}', space=vmem, size = 0x200, scoped, tag = 'scoped memory for tpu_custom_call.1']
  %s0 = inlined_call_operand.vmem [shape: f32[64,4], index: 0, kind: input, shape index: {}]
  %s1 = inlined_call_operand.vmem [shape: f32[4,128], index: 1, kind: input, shape index: {}]
  %s2 = inlined_call_operand.vmem [shape: f32[128,128], index: 2, kind: input, shape index: {}]
  %s3 = inlined_call_operand.vmem [shape: f32[1,128], index: 3, kind: input, shape index: {}]
  %s4 = inlined_call_operand.vmem [shape: f32[128,1], index: 4, kind: input, shape index: {}]
  %s5 = inlined_call_operand.<no memory space> [shape: f32[1,1], index: 5, kind: input, shape index: {}]
  %s6 = inlined_call_operand.vmem [shape: f32[8,1], index: 6, kind: output, shape index: {}]
  %s7 = sld [smem:[#allocation0]]
  $region34: #{tpu_custom_call.1} parent=0
    _
  %s9 = ssub.s32 1, %s7
  %s10 = scalar_select 0, %s9, %s7
  %v11 = vstv %s5
  %12 = vst [vmem:[#allocation3] sm:$0x1] %v11
  // Predicated region
  $region2: #{tpu_custom_call.1} parent=0 // pred_check
    _
  $region3: #{tpu_custom_call.1} parent=0 // pred_check_branch
    %14 = sbr.rel (0) target = $region5
  $region4: #{tpu_custom_call.1} parent=0 // pred_region
    _
  $region5: #{tpu_custom_call.1} parent=0 // pred_fallthru
    _
  // Predicated region
  $region6: #{tpu_custom_call.1} parent=0 // pred_check
    _
  $region7: #{tpu_custom_call.1} parent=0 // pred_check_branch
    %16 = sbr.rel (0) target = $region9
  $region8: #{tpu_custom_call.1} parent=0 // pred_region
    _
  $region9: #{tpu_custom_call.1} parent=0 // pred_fallthru
    _
  // Predicated region
  $region10: #{tpu_custom_call.1} parent=0 // pred_check
    _
  $region11: #{tpu_custom_call.1} parent=0 // pred_check_branch
    %18 = sbr.rel (0) target = $region13
  $region12: #{tpu_custom_call.1} parent=0 // pred_region
    _
  $region13: #{tpu_custom_call.1} parent=0 // pred_fallthru
    _
  // Predicated region
  $region14: #{tpu_custom_call.1} parent=0 // pred_check
    _
  $region15: #{tpu_custom_call.1} parent=0 // pred_check_branch
    %20 = sbr.rel (0) target = $region17
  $region16: #{tpu_custom_call.1} parent=0 // pred_region
    _
  $region17: #{tpu_custom_call.1} parent=0 // pred_fallthru
    _
  // Predicated region
  $region18: #{tpu_custom_call.1} parent=0 // pred_check
    _
  $region19: #{tpu_custom_call.1} parent=0 // pred_check_branch
    %22 = sbr.rel (0) target = $region21
  $region20: #{tpu_custom_call.1} parent=0 // pred_region
    _
  $region21: #{tpu_custom_call.1} parent=0 // pred_fallthru
    _
  // Predicated region
  $region22: #{tpu_custom_call.1} parent=0 // pred_check
    _
  $region23: #{tpu_custom_call.1} parent=0 // pred_check_branch
    %24 = sbr.rel (0) target = $region25
  $region24: #{tpu_custom_call.1} parent=0 // pred_region
    _
  $region25: #{tpu_custom_call.1} parent=0 // pred_fallthru
    _
  %v25 = vld [vmem:[%s1] sm:$0xf]
  %v26 = vld [vmem:[%s2] sm:$0xff]
  %v27 = vld [vmem:[%s2 + $0x8] sm:$0xff]
  %v28 = vld [vmem:[%s2 + $0x10] sm:$0xff]
  %v29 = vld [vmem:[%s2 + $0x18] sm:$0xff]
  %v30 = vld [vmem:[%s2 + $0x20] sm:$0xff]
  %v31 = vld [vmem:[%s2 + $0x28] sm:$0xff]
  %v32 = vld [vmem:[%s2 + $0x30] sm:$0xff]
  %v33 = vld [vmem:[%s2 + $0x38] sm:$0xff]
  %v34 = vld [vmem:[%s2 + $0x40] sm:$0xff]
  %v35 = vld [vmem:[%s2 + $0x48] sm:$0xff]
  %v36 = vld [vmem:[%s2 + $0x50] sm:$0xff]
  %v37 = vld [vmem:[%s2 + $0x58] sm:$0xff]
  %v38 = vld [vmem:[%s2 + $0x60] sm:$0xff]
  %v39 = vld [vmem:[%s2 + $0x68] sm:$0xff]
  %v40 = vld [vmem:[%s2 + $0x70] sm:$0xff]
  %v41 = vld [vmem:[%s2 + $0x78] sm:$0xff]
  %v42 = vld [vmem:[%s3] sm:$0x1]
  %v43 = vld [vmem:[%s0] sm:$0xff]
  %v44 = vld [vmem:[%s0 + $0x8] sm:$0xff]
  %v45 = vld [vmem:[%s0 + $0x10] sm:$0xff]
  %v46 = vld [vmem:[%s0 + $0x18] sm:$0xff]
  %v47 = vld [vmem:[%s0 + $0x20] sm:$0xff]
  %v48 = vld [vmem:[%s0 + $0x28] sm:$0xff]
  %v49 = vld [vmem:[%s0 + $0x30] sm:$0xff]
  %v50 = vld [vmem:[%s0 + $0x38] sm:$0xff]
  %v52 = vlaneseq
  %v53 = vshrl.u32 %v52, 7
  %v54 = vsub.s32 0, %v53
  %v55 = vrot.slane %v42, %v54
  %vm57 = vcmask 31744
  %v59 = vsel %vm57, %v43, 0
  %v62 = vsel %vm57, %v44, 0
  %v65 = vsel %vm57, %v45, 0
  %v68 = vsel %vm57, %v46, 0
  %v71 = vsel %vm57, %v47, 0
  %v74 = vsel %vm57, %v48, 0
  %v77 = vsel %vm57, %v49, 0
  %v80 = vsel %vm57, %v50, 0
  %vm82 = vcmask 1043456
  %v84 = vsel %vm82, %v25, 0
  %86 = vmatprep.subr.mxu0 0.0
  %87 = vmatpush1.msra.mxu0 %v84
  %88 = vmatprep.subr.mxu0 0.0
  %89 = vmatpush1.msra.mxu0 0.0
  %90 = vmatprep.subr.mxu0 0.0
  %91 = vmatpush1.msra.mxu0 0.0
  %92 = vmatprep.subr.mxu0 0.0
  %93 = vmatpush1.msra.mxu0 0.0
  %94 = vmatprep.subr.mxu0 0.0
  %95 = vmatpush1.msra.mxu0 0.0
  %96 = vmatprep.subr.mxu0 0.0
  %97 = vmatpush1.msra.mxu0 0.0
  %98 = vmatprep.subr.mxu0 0.0
  %99 = vmatpush1.msra.mxu0 0.0
  %100 = vmatprep.subr.mxu0 0.0
  %101 = vmatpush1.msra.mxu0 0.0
  %102 = vmatprep.subr.mxu0 0.0
  %103 = vmatpush1.msra.mxu0 0.0
  %104 = vmatprep.subr.mxu0 0.0
  %105 = vmatpush1.msra.mxu0 0.0
  %106 = vmatprep.subr.mxu0 0.0
  %107 = vmatpush1.msra.mxu0 0.0
  %108 = vmatprep.subr.mxu0 0.0
  %109 = vmatpush1.msra.mxu0 0.0
  %110 = vmatprep.subr.mxu0 0.0
  %111 = vmatpush1.msra.mxu0 0.0
  %112 = vmatprep.subr.mxu0 0.0
  %113 = vmatpush1.msra.mxu0 0.0
  %114 = vmatprep.subr.mxu0 0.0
  %115 = vmatpush1.msra.mxu0 0.0
  %116 = vmatprep.subr.mxu0 0.0
  %117 = vmatpush1.msra.mxu0 0.0
  %118 = vmatprep.subr.mxu0 0.0
  %119 = vmatpush1.msra.mxu0 0.0
  %120 = vmatprep.subr.mxu0 0.0
  %121 = vmatpush1.msra.mxu0 0.0
  %122 = vmatprep.subr.mxu0 0.0
  %123 = vmatpush1.msra.mxu0 0.0
  %124 = vmatprep.subr.mxu0 0.0
  %125 = vmatpush1.msra.mxu0 0.0
  %126 = vmatprep.subr.mxu0 0.0
  %127 = vmatpush1.msra.mxu0 0.0
  %128 = vmatprep.subr.mxu0 0.0
  %129 = vmatpush1.msra.mxu0 0.0
  %130 = vmatprep.subr.mxu0 0.0
  %131 = vmatpush1.msra.mxu0 0.0
  %132 = vmatprep.subr.mxu0 0.0
  %133 = vmatpush1.msra.mxu0 0.0
  %134 = vmatprep.subr.mxu0 0.0
  %135 = vmatpush1.msra.mxu0 0.0
  %136 = vmatprep.subr.mxu0 0.0
  %137 = vmatpush1.msra.mxu0 0.0
  %138 = vmatprep.subr.mxu0 0.0
  %139 = vmatpush1.msra.mxu0 0.0
  %140 = vmatprep.subr.mxu0 0.0
  %141 = vmatpush1.msra.mxu0 0.0
  %142 = vmatprep.subr.mxu0 0.0
  %143 = vmatpush1.msra.mxu0 0.0
  %144 = vmatprep.subr.mxu0 0.0
  %145 = vmatpush1.msra.mxu0 0.0
  %146 = vmatprep.subr.mxu0 0.0
  %147 = vmatpush1.msra.mxu0 0.0
  %148 = vmatprep.subr.mxu0 0.0
  %149 = vmatpush1.msra.mxu0 0.0
  %150 = vmatprep.mubr.f32.mxu0 0.0
  %151 = vmatmul.mubr.f32.gmra.mrb[0].mxu0 %v59
  %v152 = vpop.f32.mrb[0].mxu0
  %v153 = vadd.f32 %v55, %v152
  %v154 = vpop.f32.mrb[0].mxu0
  %155 = vmatprep.mubr.f32.mxu0 0.0
  %156 = vmatmul.mubr.f32.gmra.mrb[0].mxu0 %v62
  %v157 = vpop.f32.mrb[0].mxu0
  %v158 = vadd.f32 %v55, %v157
  %v159 = vpop.f32.mrb[0].mxu0
  %160 = vmatprep.mubr.f32.mxu0 0.0
  %161 = vmatmul.mubr.f32.gmra.mrb[0].mxu0 %v65
  %v162 = vpop.f32.mrb[0].mxu0
  %v163 = vadd.f32 %v55, %v162
  %v164 = vpop.f32.mrb[0].mxu0
  %165 = vmatprep.mubr.f32.mxu0 0.0
  %166 = vmatmul.mubr.f32.gmra.mrb[0].mxu0 %v68
  %v167 = vpop.f32.mrb[0].mxu0
  %v168 = vadd.f32 %v55, %v167
  %v169 = vpop.f32.mrb[0].mxu0
  %170 = vmatprep.mubr.f32.mxu0 0.0
  %171 = vmatmul.mubr.f32.gmra.mrb[0].mxu0 %v71
  %v172 = vpop.f32.mrb[0].mxu0
  %v173 = vadd.f32 %v55, %v172
  %v174 = vpop.f32.mrb[0].mxu0
  %175 = vmatprep.mubr.f32.mxu0 0.0
  %176 = vmatmul.mubr.f32.gmra.mrb[0].mxu0 %v74
  %v177 = vpop.f32.mrb[0].mxu0
  %v178 = vadd.f32 %v55, %v177
  %v179 = vpop.f32.mrb[0].mxu0
  %180 = vmatprep.mubr.f32.mxu0 0.0
  %181 = vmatmul.mubr.f32.gmra.mrb[0].mxu0 %v77
  %v182 = vpop.f32.mrb[0].mxu0
  %v183 = vadd.f32 %v55, %v182
  %v184 = vpop.f32.mrb[0].mxu0
  %185 = vmatprep.mubr.f32.mxu0 0.0
  %186 = vmatmul.mubr.f32.gmra.mrb[0].mxu0 %v80
  %v187 = vpop.f32.mrb[0].mxu0
  %v188 = vadd.f32 %v55, %v187
  %v189 = vpop.f32.mrb[0].mxu0
  %190 = vdwg.mxu0
  %191 = vst [vmem:[#allocation2] sm:$0xff] %v153
  %192 = vst [vmem:[#allocation2 + $0x8] sm:$0xff] %v158
  %193 = vst [vmem:[#allocation2 + $0x10] sm:$0xff] %v163
  %194 = vst [vmem:[#allocation2 + $0x18] sm:$0xff] %v168
  %195 = vst [vmem:[#allocation2 + $0x20] sm:$0xff] %v173
  %196 = vst [vmem:[#allocation2 + $0x28] sm:$0xff] %v178
  %197 = vst [vmem:[#allocation2 + $0x30] sm:$0xff] %v183
  %198 = vst [vmem:[#allocation2 + $0x38] sm:$0xff] %v188
  %v199 = vlaneseq
  %v200 = vand.u32 %v199, 127
  %vm201 = vcmp.ge.s32.totalorder %v200, 64
  %vm202 = vcmp.lt.s32.totalorder %v200, 96
  %vm203 = vmand %vm201, %vm202
  %vm204 = vcmp.lt.s32.totalorder %v200, 32
  %v205 = vld [vmem:[#allocation2] sm:$0xff]
  %206 = vmatprep.subr.mxu0 0.0
  %207 = vmatpush1.msra.mxu0 %v26
  %208 = vmatprep.subr.mxu0 0.0
  %209 = vmatpush1.msra.mxu0 %v27
  %210 = vmatprep.subr.mxu0 0.0
  %211 = vmatpush1.msra.mxu0 %v28
  %212 = vmatprep.subr.mxu0 0.0
  %213 = vmatpush1.msra.mxu0 %v29
  %214 = vmatprep.subr.mxu0 0.0
  %215 = vmatpush1.msra.mxu0 %v30
  %216 = vmatprep.subr.mxu0 0.0
  %217 = vmatpush1.msra.mxu0 %v31
  %218 = vmatprep.subr.mxu0 0.0
  %219 = vmatpush1.msra.mxu0 %v32
  %220 = vmatprep.subr.mxu0 0.0
  %221 = vmatpush1.msra.mxu0 %v33
  %222 = vmatprep.subr.mxu0 0.0
  %223 = vmatpush1.msra.mxu0 %v34
  %224 = vmatprep.subr.mxu0 0.0
  %225 = vmatpush1.msra.mxu0 %v35
  %226 = vmatprep.subr.mxu0 0.0
  %227 = vmatpush1.msra.mxu0 %v36
  %228 = vmatprep.subr.mxu0 0.0
  %229 = vmatpush1.msra.mxu0 %v37
  %230 = vmatprep.subr.mxu0 0.0
  %231 = vmatpush1.msra.mxu0 %v38
  %232 = vmatprep.subr.mxu0 0.0
  %233 = vmatpush1.msra.mxu0 %v39
  %234 = vmatprep.subr.mxu0 0.0
  %235 = vmatpush1.msra.mxu0 %v40
  %236 = vmatprep.subr.mxu0 0.0
  %237 = vmatpush1.msra.mxu0 %v41
  %238 = vmatprep.subr.mxu0 0.0
  %239 = vmatpush1.msra.mxu0 0.0
  %240 = vmatprep.subr.mxu0 0.0
  %241 = vmatpush1.msra.mxu0 0.0
  %242 = vmatprep.subr.mxu0 0.0
  %243 = vmatpush1.msra.mxu0 0.0
  %244 = vmatprep.subr.mxu0 0.0
  %245 = vmatpush1.msra.mxu0 0.0
  %246 = vmatprep.subr.mxu0 0.0
  %247 = vmatpush1.msra.mxu0 0.0
  %248 = vmatprep.subr.mxu0 0.0
  %249 = vmatpush1.msra.mxu0 0.0
  %250 = vmatprep.subr.mxu0 0.0
  %251 = vmatpush1.msra.mxu0 0.0
  %252 = vmatprep.subr.mxu0 0.0
  %253 = vmatpush1.msra.mxu0 0.0
  %254 = vmatprep.subr.mxu0 0.0
  %255 = vmatpush1.msra.mxu0 0.0
  %256 = vmatprep.subr.mxu0 0.0
  %257 = vmatpush1.msra.mxu0 0.0
  %258 = vmatprep.subr.mxu0 0.0
  %259 = vmatpush1.msra.mxu0 0.0
  %260 = vmatprep.subr.mxu0 0.0
  %261 = vmatpush1.msra.mxu0 0.0
  %262 = vmatprep.subr.mxu0 0.0
  %263 = vmatpush1.msra.mxu0 0.0
  %264 = vmatprep.subr.mxu0 0.0
  %265 = vmatpush1.msra.mxu0 0.0
  %266 = vmatprep.subr.mxu0 0.0
  %267 = vmatpush1.msra.mxu0 0.0
  %268 = vmatprep.subr.mxu0 0.0
  %269 = vmatpush1.msra.mxu0 0.0
  %270 = vmatprep.mubr.f32.mxu0 0.0
  %271 = vmatmul.mubr.f32.gmra.mrb[0].mxu0 0.0
  %v272 = vpop.f32.mrb[0].mxu0
  %v273 = vadd.f32 0.0, %v272
  %v274 = vpop.f32.mrb[0].mxu0
  %275 = vdwg.mxu0
  %v276 = vadd.f32 %v205, %v273
  %v277 = vtanh.pop %v276
  %v278 = vxor.u32 %v276, 2147483648
  %v279 = vmul.f32 %v278, 1.442695
  %v280 = vpow.pop %v279
  %v281 = vadd.f32 %v280, 1.0
  %v282 = vrcp.pop %v281
  %v283 = vmul.f32 1.0, %v282
  %v284 = vsel %vm203, %v277, %v283
  %285 = vrot.lane.b32.xlu0 %v284, 96
  %v286 = vpop.permute.xlu0 %285
  %287 = vrot.lane.b32.xlu0 %v284, 64
  %v288 = vpop.permute.xlu0 %287
  %289 = vrot.lane.b32.xlu0 %v284, 32
  %v290 = vpop.permute.xlu0 %289
  %v291 = vmul.f32 %v286, 0.0
  %v292 = vmul.f32 %v284, %v288
  %v293 = vadd.f32 %v291, %v292
  %v294 = vsel %vm204, %v293, 0.0
  %v295 = vtanh.pop %v294
  %v296 = vmul.f32 %v290, %v295
  %s297 = scalar_lea.vmem [#allocation2], 8
  %v298 = vld [vmem:[%s297] sm:$0xff]
  %299 = vmatprep.subr.mxu0 0.0
  %300 = vmatpush1.msra.mxu0 %v26
  %301 = vmatprep.subr.mxu0 0.0
  %302 = vmatpush1.msra.mxu0 %v27
  %303 = vmatprep.subr.mxu0 0.0
  %304 = vmatpush1.msra.mxu0 %v28
  %305 = vmatprep.subr.mxu0 0.0
  %306 = vmatpush1.msra.mxu0 %v29
  %307 = vmatprep.subr.mxu0 0.0
  %308 = vmatpush1.msra.mxu0 %v30
  %309 = vmatprep.subr.mxu0 0.0
  %310 = vmatpush1.msra.mxu0 %v31
  %311 = vmatprep.subr.mxu0 0.0
  %312 = vmatpush1.msra.mxu0 %v32
  %313 = vmatprep.subr.mxu0 0.0
  %314 = vmatpush1.msra.mxu0 %v33
  %315 = vmatprep.subr.mxu0 0.0
  %316 = vmatpush1.msra.mxu0 %v34
  %317 = vmatprep.subr.mxu0 0.0
  %318 = vmatpush1.msra.mxu0 %v35
  %319 = vmatprep.subr.mxu0 0.0
  %320 = vmatpush1.msra.mxu0 %v36
  %321 = vmatprep.subr.mxu0 0.0
  %322 = vmatpush1.msra.mxu0 %v37
  %323 = vmatprep.subr.mxu0 0.0
  %324 = vmatpush1.msra.mxu0 %v38
  %325 = vmatprep.subr.mxu0 0.0
  %326 = vmatpush1.msra.mxu0 %v39
  %327 = vmatprep.subr.mxu0 0.0
  %328 = vmatpush1.msra.mxu0 %v40
  %329 = vmatprep.subr.mxu0 0.0
  %330 = vmatpush1.msra.mxu0 %v41
  %331 = vmatprep.subr.mxu0 0.0
  %332 = vmatpush1.msra.mxu0 0.0
  %333 = vmatprep.subr.mxu0 0.0
  %334 = vmatpush1.msra.mxu0 0.0
  %335 = vmatprep.subr.mxu0 0.0
  %336 = vmatpush1.msra.mxu0 0.0
  %337 = vmatprep.subr.mxu0 0.0
  %338 = vmatpush1.msra.mxu0 0.0
  %339 = vmatprep.subr.mxu0 0.0
  %340 = vmatpush1.msra.mxu0 0.0
  %341 = vmatprep.subr.mxu0 0.0
  %342 = vmatpush1.msra.mxu0 0.0
  %343 = vmatprep.subr.mxu0 0.0
  %344 = vmatpush1.msra.mxu0 0.0
  %345 = vmatprep.subr.mxu0 0.0
  %346 = vmatpush1.msra.mxu0 0.0
  %347 = vmatprep.subr.mxu0 0.0
  %348 = vmatpush1.msra.mxu0 0.0
  %349 = vmatprep.subr.mxu0 0.0
  %350 = vmatpush1.msra.mxu0 0.0
  %351 = vmatprep.subr.mxu0 0.0
  %352 = vmatpush1.msra.mxu0 0.0
  %353 = vmatprep.subr.mxu0 0.0
  %354 = vmatpush1.msra.mxu0 0.0
  %355 = vmatprep.subr.mxu0 0.0
  %356 = vmatpush1.msra.mxu0 0.0
  %357 = vmatprep.subr.mxu0 0.0
  %358 = vmatpush1.msra.mxu0 0.0
  %359 = vmatprep.subr.mxu0 0.0
  %360 = vmatpush1.msra.mxu0 0.0
  %361 = vmatprep.subr.mxu0 0.0
  %362 = vmatpush1.msra.mxu0 0.0
  %363 = vmatprep.mubr.f32.mxu0 0.0
  %364 = vmatmul.mubr.f32.gmra.mrb[0].mxu0 %v296
  %v365 = vpop.f32.mrb[0].mxu0
  %v366 = vadd.f32 0.0, %v365
  %v367 = vpop.f32.mrb[0].mxu0
  %368 = vdwg.mxu0
  %v369 = vadd.f32 %v298, %v366
  %v370 = vtanh.pop %v369
  %v371 = vxor.u32 %v369, 2147483648
  %v372 = vmul.f32 %v371, 1.442695
  %v373 = vpow.pop %v372
  %v374 = vadd.f32 %v373, 1.0
  %v375 = vrcp.pop %v374
  %v376 = vmul.f32 1.0, %v375
  %v377 = vsel %vm203, %v370, %v376
  %378 = vrot.lane.b32.xlu0 %v377, 96
  %v379 = vpop.permute.xlu0 %378
  %380 = vrot.lane.b32.xlu0 %v377, 64
  %v381 = vpop.permute.xlu0 %380
  %382 = vrot.lane.b32.xlu0 %v377, 32
  %v383 = vpop.permute.xlu0 %382
  %v384 = vmul.f32 %v379, %v294
  %v385 = vmul.f32 %v377, %v381
  %v386 = vadd.f32 %v384, %v385
  %v387 = vsel %vm204, %v386, 0.0
  %v388 = vtanh.pop %v387
  %v389 = vmul.f32 %v383, %v388
  %s390 = scalar_lea.vmem [#allocation2], 16
  %v391 = vld [vmem:[%s390] sm:$0xff]
  %392 = vmatprep.subr.mxu0 0.0
  %393 = vmatpush1.msra.mxu0 %v26
  %394 = vmatprep.subr.mxu0 0.0
  %395 = vmatpush1.msra.mxu0 %v27
  %396 = vmatprep.subr.mxu0 0.0
  %397 = vmatpush1.msra.mxu0 %v28
  %398 = vmatprep.subr.mxu0 0.0
  %399 = vmatpush1.msra.mxu0 %v29
  %400 = vmatprep.subr.mxu0 0.0
  %401 = vmatpush1.msra.mxu0 %v30
  %402 = vmatprep.subr.mxu0 0.0
  %403 = vmatpush1.msra.mxu0 %v31
  %404 = vmatprep.subr.mxu0 0.0
  %405 = vmatpush1.msra.mxu0 %v32
  %406 = vmatprep.subr.mxu0 0.0
  %407 = vmatpush1.msra.mxu0 %v33
  %408 = vmatprep.subr.mxu0 0.0
  %409 = vmatpush1.msra.mxu0 %v34
  %410 = vmatprep.subr.mxu0 0.0
  %411 = vmatpush1.msra.mxu0 %v35
  %412 = vmatprep.subr.mxu0 0.0
  %413 = vmatpush1.msra.mxu0 %v36
  %414 = vmatprep.subr.mxu0 0.0
  %415 = vmatpush1.msra.mxu0 %v37
  %416 = vmatprep.subr.mxu0 0.0
  %417 = vmatpush1.msra.mxu0 %v38
  %418 = vmatprep.subr.mxu0 0.0
  %419 = vmatpush1.msra.mxu0 %v39
  %420 = vmatprep.subr.mxu0 0.0
  %421 = vmatpush1.msra.mxu0 %v40
  %422 = vmatprep.subr.mxu0 0.0
  %423 = vmatpush1.msra.mxu0 %v41
  %424 = vmatprep.subr.mxu0 0.0
  %425 = vmatpush1.msra.mxu0 0.0
  %426 = vmatprep.subr.mxu0 0.0
  %427 = vmatpush1.msra.mxu0 0.0
  %428 = vmatprep.subr.mxu0 0.0
  %429 = vmatpush1.msra.mxu0 0.0
  %430 = vmatprep.subr.mxu0 0.0
  %431 = vmatpush1.msra.mxu0 0.0
  %432 = vmatprep.subr.mxu0 0.0
  %433 = vmatpush1.msra.mxu0 0.0
  %434 = vmatprep.subr.mxu0 0.0
  %435 = vmatpush1.msra.mxu0 0.0
  %436 = vmatprep.subr.mxu0 0.0
  %437 = vmatpush1.msra.mxu0 0.0
  %438 = vmatprep.subr.mxu0 0.0
  %439 = vmatpush1.msra.mxu0 0.0
  %440 = vmatprep.subr.mxu0 0.0
  %441 = vmatpush1.msra.mxu0 0.0
  %442 = vmatprep.subr.mxu0 0.0
  %443 = vmatpush1.msra.mxu0 0.0
  %444 = vmatprep.subr.mxu0 0.0
  %445 = vmatpush1.msra.mxu0 0.0
  %446 = vmatprep.subr.mxu0 0.0
  %447 = vmatpush1.msra.mxu0 0.0
  %448 = vmatprep.subr.mxu0 0.0
  %449 = vmatpush1.msra.mxu0 0.0
  %450 = vmatprep.subr.mxu0 0.0
  %451 = vmatpush1.msra.mxu0 0.0
  %452 = vmatprep.subr.mxu0 0.0
  %453 = vmatpush1.msra.mxu0 0.0
  %454 = vmatprep.subr.mxu0 0.0
  %455 = vmatpush1.msra.mxu0 0.0
  %456 = vmatprep.mubr.f32.mxu0 0.0
  %457 = vmatmul.mubr.f32.gmra.mrb[0].mxu0 %v389
  %v458 = vpop.f32.mrb[0].mxu0
  %v459 = vadd.f32 0.0, %v458
  %v460 = vpop.f32.mrb[0].mxu0
  %461 = vdwg.mxu0
  %v462 = vadd.f32 %v391, %v459
  %v463 = vtanh.pop %v462
  %v464 = vxor.u32 %v462, 2147483648
  %v465 = vmul.f32 %v464, 1.442695
  %v466 = vpow.pop %v465
  %v467 = vadd.f32 %v466, 1.0
  %v468 = vrcp.pop %v467
  %v469 = vmul.f32 1.0, %v468
  %v470 = vsel %vm203, %v463, %v469
  %471 = vrot.lane.b32.xlu0 %v470, 96
  %v472 = vpop.permute.xlu0 %471
  %473 = vrot.lane.b32.xlu0 %v470, 64
  %v474 = vpop.permute.xlu0 %473
  %475 = vrot.lane.b32.xlu0 %v470, 32
  %v476 = vpop.permute.xlu0 %475
  %v477 = vmul.f32 %v472, %v387
  %v478 = vmul.f32 %v470, %v474
  %v479 = vadd.f32 %v477, %v478
  %v480 = vsel %vm204, %v479, 0.0
  %v481 = vtanh.pop %v480
  %v482 = vmul.f32 %v476, %v481
  %s483 = scalar_lea.vmem [#allocation2], 24
  %v484 = vld [vmem:[%s483] sm:$0xff]
  %485 = vmatprep.subr.mxu0 0.0
  %486 = vmatpush1.msra.mxu0 %v26
  %487 = vmatprep.subr.mxu0 0.0
  %488 = vmatpush1.msra.mxu0 %v27
  %489 = vmatprep.subr.mxu0 0.0
  %490 = vmatpush1.msra.mxu0 %v28
  %491 = vmatprep.subr.mxu0 0.0
  %492 = vmatpush1.msra.mxu0 %v29
  %493 = vmatprep.subr.mxu0 0.0
  %494 = vmatpush1.msra.mxu0 %v30
  %495 = vmatprep.subr.mxu0 0.0
  %496 = vmatpush1.msra.mxu0 %v31
  %497 = vmatprep.subr.mxu0 0.0
  %498 = vmatpush1.msra.mxu0 %v32
  %499 = vmatprep.subr.mxu0 0.0
  %500 = vmatpush1.msra.mxu0 %v33
  %501 = vmatprep.subr.mxu0 0.0
  %502 = vmatpush1.msra.mxu0 %v34
  %503 = vmatprep.subr.mxu0 0.0
  %504 = vmatpush1.msra.mxu0 %v35
  %505 = vmatprep.subr.mxu0 0.0
  %506 = vmatpush1.msra.mxu0 %v36
  %507 = vmatprep.subr.mxu0 0.0
  %508 = vmatpush1.msra.mxu0 %v37
  %509 = vmatprep.subr.mxu0 0.0
  %510 = vmatpush1.msra.mxu0 %v38
  %511 = vmatprep.subr.mxu0 0.0
  %512 = vmatpush1.msra.mxu0 %v39
  %513 = vmatprep.subr.mxu0 0.0
  %514 = vmatpush1.msra.mxu0 %v40
  %515 = vmatprep.subr.mxu0 0.0
  %516 = vmatpush1.msra.mxu0 %v41
  %517 = vmatprep.subr.mxu0 0.0
  %518 = vmatpush1.msra.mxu0 0.0
  %519 = vmatprep.subr.mxu0 0.0
  %520 = vmatpush1.msra.mxu0 0.0
  %521 = vmatprep.subr.mxu0 0.0
  %522 = vmatpush1.msra.mxu0 0.0
  %523 = vmatprep.subr.mxu0 0.0
  %524 = vmatpush1.msra.mxu0 0.0
  %525 = vmatprep.subr.mxu0 0.0
  %526 = vmatpush1.msra.mxu0 0.0
  %527 = vmatprep.subr.mxu0 0.0
  %528 = vmatpush1.msra.mxu0 0.0
  %529 = vmatprep.subr.mxu0 0.0
  %530 = vmatpush1.msra.mxu0 0.0
  %531 = vmatprep.subr.mxu0 0.0
  %532 = vmatpush1.msra.mxu0 0.0
  %533 = vmatprep.subr.mxu0 0.0
  %534 = vmatpush1.msra.mxu0 0.0
  %535 = vmatprep.subr.mxu0 0.0
  %536 = vmatpush1.msra.mxu0 0.0
  %537 = vmatprep.subr.mxu0 0.0
  %538 = vmatpush1.msra.mxu0 0.0
  %539 = vmatprep.subr.mxu0 0.0
  %540 = vmatpush1.msra.mxu0 0.0
  %541 = vmatprep.subr.mxu0 0.0
  %542 = vmatpush1.msra.mxu0 0.0
  %543 = vmatprep.subr.mxu0 0.0
  %544 = vmatpush1.msra.mxu0 0.0
  %545 = vmatprep.subr.mxu0 0.0
  %546 = vmatpush1.msra.mxu0 0.0
  %547 = vmatprep.subr.mxu0 0.0
  %548 = vmatpush1.msra.mxu0 0.0
  %549 = vmatprep.mubr.f32.mxu0 0.0
  %550 = vmatmul.mubr.f32.gmra.mrb[0].mxu0 %v482
  %v551 = vpop.f32.mrb[0].mxu0
  %v552 = vadd.f32 0.0, %v551
  %v553 = vpop.f32.mrb[0].mxu0
  %554 = vdwg.mxu0
  %v555 = vadd.f32 %v484, %v552
  %v556 = vtanh.pop %v555
  %v557 = vxor.u32 %v555, 2147483648
  %v558 = vmul.f32 %v557, 1.442695
  %v559 = vpow.pop %v558
  %v560 = vadd.f32 %v559, 1.0
  %v561 = vrcp.pop %v560
  %v562 = vmul.f32 1.0, %v561
  %v563 = vsel %vm203, %v556, %v562
  %564 = vrot.lane.b32.xlu0 %v563, 96
  %v565 = vpop.permute.xlu0 %564
  %566 = vrot.lane.b32.xlu0 %v563, 64
  %v567 = vpop.permute.xlu0 %566
  %568 = vrot.lane.b32.xlu0 %v563, 32
  %v569 = vpop.permute.xlu0 %568
  %v570 = vmul.f32 %v565, %v480
  %v571 = vmul.f32 %v563, %v567
  %v572 = vadd.f32 %v570, %v571
  %v573 = vsel %vm204, %v572, 0.0
  %v574 = vtanh.pop %v573
  %v575 = vmul.f32 %v569, %v574
  %s576 = scalar_lea.vmem [#allocation2], 32
  %v577 = vld [vmem:[%s576] sm:$0xff]
  %578 = vmatprep.subr.mxu0 0.0
  %579 = vmatpush1.msra.mxu0 %v26
  %580 = vmatprep.subr.mxu0 0.0
  %581 = vmatpush1.msra.mxu0 %v27
  %582 = vmatprep.subr.mxu0 0.0
  %583 = vmatpush1.msra.mxu0 %v28
  %584 = vmatprep.subr.mxu0 0.0
  %585 = vmatpush1.msra.mxu0 %v29
  %586 = vmatprep.subr.mxu0 0.0
  %587 = vmatpush1.msra.mxu0 %v30
  %588 = vmatprep.subr.mxu0 0.0
  %589 = vmatpush1.msra.mxu0 %v31
  %590 = vmatprep.subr.mxu0 0.0
  %591 = vmatpush1.msra.mxu0 %v32
  %592 = vmatprep.subr.mxu0 0.0
  %593 = vmatpush1.msra.mxu0 %v33
  %594 = vmatprep.subr.mxu0 0.0
  %595 = vmatpush1.msra.mxu0 %v34
  %596 = vmatprep.subr.mxu0 0.0
  %597 = vmatpush1.msra.mxu0 %v35
  %598 = vmatprep.subr.mxu0 0.0
  %599 = vmatpush1.msra.mxu0 %v36
  %600 = vmatprep.subr.mxu0 0.0
  %601 = vmatpush1.msra.mxu0 %v37
  %602 = vmatprep.subr.mxu0 0.0
  %603 = vmatpush1.msra.mxu0 %v38
  %604 = vmatprep.subr.mxu0 0.0
  %605 = vmatpush1.msra.mxu0 %v39
  %606 = vmatprep.subr.mxu0 0.0
  %607 = vmatpush1.msra.mxu0 %v40
  %608 = vmatprep.subr.mxu0 0.0
  %609 = vmatpush1.msra.mxu0 %v41
  %610 = vmatprep.subr.mxu0 0.0
  %611 = vmatpush1.msra.mxu0 0.0
  %612 = vmatprep.subr.mxu0 0.0
  %613 = vmatpush1.msra.mxu0 0.0
  %614 = vmatprep.subr.mxu0 0.0
  %615 = vmatpush1.msra.mxu0 0.0
  %616 = vmatprep.subr.mxu0 0.0
  %617 = vmatpush1.msra.mxu0 0.0
  %618 = vmatprep.subr.mxu0 0.0
  %619 = vmatpush1.msra.mxu0 0.0
  %620 = vmatprep.subr.mxu0 0.0
  %621 = vmatpush1.msra.mxu0 0.0
  %622 = vmatprep.subr.mxu0 0.0
  %623 = vmatpush1.msra.mxu0 0.0
  %624 = vmatprep.subr.mxu0 0.0
  %625 = vmatpush1.msra.mxu0 0.0
  %626 = vmatprep.subr.mxu0 0.0
  %627 = vmatpush1.msra.mxu0 0.0
  %628 = vmatprep.subr.mxu0 0.0
  %629 = vmatpush1.msra.mxu0 0.0
  %630 = vmatprep.subr.mxu0 0.0
  %631 = vmatpush1.msra.mxu0 0.0
  %632 = vmatprep.subr.mxu0 0.0
  %633 = vmatpush1.msra.mxu0 0.0
  %634 = vmatprep.subr.mxu0 0.0
  %635 = vmatpush1.msra.mxu0 0.0
  %636 = vmatprep.subr.mxu0 0.0
  %637 = vmatpush1.msra.mxu0 0.0
  %638 = vmatprep.subr.mxu0 0.0
  %639 = vmatpush1.msra.mxu0 0.0
  %640 = vmatprep.subr.mxu0 0.0
  %641 = vmatpush1.msra.mxu0 0.0
  %642 = vmatprep.mubr.f32.mxu0 0.0
  %643 = vmatmul.mubr.f32.gmra.mrb[0].mxu0 %v575
  %v644 = vpop.f32.mrb[0].mxu0
  %v645 = vadd.f32 0.0, %v644
  %v646 = vpop.f32.mrb[0].mxu0
  %647 = vdwg.mxu0
  %v648 = vadd.f32 %v577, %v645
  %v649 = vtanh.pop %v648
  %v650 = vxor.u32 %v648, 2147483648
  %v651 = vmul.f32 %v650, 1.442695
  %v652 = vpow.pop %v651
  %v653 = vadd.f32 %v652, 1.0
  %v654 = vrcp.pop %v653
  %v655 = vmul.f32 1.0, %v654
  %v656 = vsel %vm203, %v649, %v655
  %657 = vrot.lane.b32.xlu0 %v656, 96
  %v658 = vpop.permute.xlu0 %657
  %659 = vrot.lane.b32.xlu0 %v656, 64
  %v660 = vpop.permute.xlu0 %659
  %661 = vrot.lane.b32.xlu0 %v656, 32
  %v662 = vpop.permute.xlu0 %661
  %v663 = vmul.f32 %v658, %v573
  %v664 = vmul.f32 %v656, %v660
  %v665 = vadd.f32 %v663, %v664
  %v666 = vsel %vm204, %v665, 0.0
  %v667 = vtanh.pop %v666
  %v668 = vmul.f32 %v662, %v667
  %s669 = scalar_lea.vmem [#allocation2], 40
  %v670 = vld [vmem:[%s669] sm:$0xff]
  %671 = vmatprep.subr.mxu0 0.0
  %672 = vmatpush1.msra.mxu0 %v26
  %673 = vmatprep.subr.mxu0 0.0
  %674 = vmatpush1.msra.mxu0 %v27
  %675 = vmatprep.subr.mxu0 0.0
  %676 = vmatpush1.msra.mxu0 %v28
  %677 = vmatprep.subr.mxu0 0.0
  %678 = vmatpush1.msra.mxu0 %v29
  %679 = vmatprep.subr.mxu0 0.0
  %680 = vmatpush1.msra.mxu0 %v30
  %681 = vmatprep.subr.mxu0 0.0
  %682 = vmatpush1.msra.mxu0 %v31
  %683 = vmatprep.subr.mxu0 0.0
  %684 = vmatpush1.msra.mxu0 %v32
  %685 = vmatprep.subr.mxu0 0.0
  %686 = vmatpush1.msra.mxu0 %v33
  %687 = vmatprep.subr.mxu0 0.0
  %688 = vmatpush1.msra.mxu0 %v34
  %689 = vmatprep.subr.mxu0 0.0
  %690 = vmatpush1.msra.mxu0 %v35
  %691 = vmatprep.subr.mxu0 0.0
  %692 = vmatpush1.msra.mxu0 %v36
  %693 = vmatprep.subr.mxu0 0.0
  %694 = vmatpush1.msra.mxu0 %v37
  %695 = vmatprep.subr.mxu0 0.0
  %696 = vmatpush1.msra.mxu0 %v38
  %697 = vmatprep.subr.mxu0 0.0
  %698 = vmatpush1.msra.mxu0 %v39
  %699 = vmatprep.subr.mxu0 0.0
  %700 = vmatpush1.msra.mxu0 %v40
  %701 = vmatprep.subr.mxu0 0.0
  %702 = vmatpush1.msra.mxu0 %v41
  %703 = vmatprep.subr.mxu0 0.0
  %704 = vmatpush1.msra.mxu0 0.0
  %705 = vmatprep.subr.mxu0 0.0
  %706 = vmatpush1.msra.mxu0 0.0
  %707 = vmatprep.subr.mxu0 0.0
  %708 = vmatpush1.msra.mxu0 0.0
  %709 = vmatprep.subr.mxu0 0.0
  %710 = vmatpush1.msra.mxu0 0.0
  %711 = vmatprep.subr.mxu0 0.0
  %712 = vmatpush1.msra.mxu0 0.0
  %713 = vmatprep.subr.mxu0 0.0
  %714 = vmatpush1.msra.mxu0 0.0
  %715 = vmatprep.subr.mxu0 0.0
  %716 = vmatpush1.msra.mxu0 0.0
  %717 = vmatprep.subr.mxu0 0.0
  %718 = vmatpush1.msra.mxu0 0.0
  %719 = vmatprep.subr.mxu0 0.0
  %720 = vmatpush1.msra.mxu0 0.0
  %721 = vmatprep.subr.mxu0 0.0
  %722 = vmatpush1.msra.mxu0 0.0
  %723 = vmatprep.subr.mxu0 0.0
  %724 = vmatpush1.msra.mxu0 0.0
  %725 = vmatprep.subr.mxu0 0.0
  %726 = vmatpush1.msra.mxu0 0.0
  %727 = vmatprep.subr.mxu0 0.0
  %728 = vmatpush1.msra.mxu0 0.0
  %729 = vmatprep.subr.mxu0 0.0
  %730 = vmatpush1.msra.mxu0 0.0
  %731 = vmatprep.subr.mxu0 0.0
  %732 = vmatpush1.msra.mxu0 0.0
  %733 = vmatprep.subr.mxu0 0.0
  %734 = vmatpush1.msra.mxu0 0.0
  %735 = vmatprep.mubr.f32.mxu0 0.0
  %736 = vmatmul.mubr.f32.gmra.mrb[0].mxu0 %v668
  %v737 = vpop.f32.mrb[0].mxu0
  %v738 = vadd.f32 0.0, %v737
  %v739 = vpop.f32.mrb[0].mxu0
  %740 = vdwg.mxu0
  %v741 = vadd.f32 %v670, %v738
  %v742 = vtanh.pop %v741
  %v743 = vxor.u32 %v741, 2147483648
  %v744 = vmul.f32 %v743, 1.442695
  %v745 = vpow.pop %v744
  %v746 = vadd.f32 %v745, 1.0
  %v747 = vrcp.pop %v746
  %v748 = vmul.f32 1.0, %v747
  %v749 = vsel %vm203, %v742, %v748
  %750 = vrot.lane.b32.xlu0 %v749, 96
  %v751 = vpop.permute.xlu0 %750
  %752 = vrot.lane.b32.xlu0 %v749, 64
  %v753 = vpop.permute.xlu0 %752
  %754 = vrot.lane.b32.xlu0 %v749, 32
  %v755 = vpop.permute.xlu0 %754
  %v756 = vmul.f32 %v751, %v666
  %v757 = vmul.f32 %v749, %v753
  %v758 = vadd.f32 %v756, %v757
  %v759 = vsel %vm204, %v758, 0.0
  %v760 = vtanh.pop %v759
  %v761 = vmul.f32 %v755, %v760
  %s762 = scalar_lea.vmem [#allocation2], 48
  %v763 = vld [vmem:[%s762] sm:$0xff]
  %764 = vmatprep.subr.mxu0 0.0
  %765 = vmatpush1.msra.mxu0 %v26
  %766 = vmatprep.subr.mxu0 0.0
  %767 = vmatpush1.msra.mxu0 %v27
  %768 = vmatprep.subr.mxu0 0.0
  %769 = vmatpush1.msra.mxu0 %v28
  %770 = vmatprep.subr.mxu0 0.0
  %771 = vmatpush1.msra.mxu0 %v29
  %772 = vmatprep.subr.mxu0 0.0
  %773 = vmatpush1.msra.mxu0 %v30
  %774 = vmatprep.subr.mxu0 0.0
  %775 = vmatpush1.msra.mxu0 %v31
  %776 = vmatprep.subr.mxu0 0.0
  %777 = vmatpush1.msra.mxu0 %v32
  %778 = vmatprep.subr.mxu0 0.0
  %779 = vmatpush1.msra.mxu0 %v33
  %780 = vmatprep.subr.mxu0 0.0
  %781 = vmatpush1.msra.mxu0 %v34
  %782 = vmatprep.subr.mxu0 0.0
  %783 = vmatpush1.msra.mxu0 %v35
  %784 = vmatprep.subr.mxu0 0.0
  %785 = vmatpush1.msra.mxu0 %v36
  %786 = vmatprep.subr.mxu0 0.0
  %787 = vmatpush1.msra.mxu0 %v37
  %788 = vmatprep.subr.mxu0 0.0
  %789 = vmatpush1.msra.mxu0 %v38
  %790 = vmatprep.subr.mxu0 0.0
  %791 = vmatpush1.msra.mxu0 %v39
  %792 = vmatprep.subr.mxu0 0.0
  %793 = vmatpush1.msra.mxu0 %v40
  %794 = vmatprep.subr.mxu0 0.0
  %795 = vmatpush1.msra.mxu0 %v41
  %796 = vmatprep.subr.mxu0 0.0
  %797 = vmatpush1.msra.mxu0 0.0
  %798 = vmatprep.subr.mxu0 0.0
  %799 = vmatpush1.msra.mxu0 0.0
  %800 = vmatprep.subr.mxu0 0.0
  %801 = vmatpush1.msra.mxu0 0.0
  %802 = vmatprep.subr.mxu0 0.0
  %803 = vmatpush1.msra.mxu0 0.0
  %804 = vmatprep.subr.mxu0 0.0
  %805 = vmatpush1.msra.mxu0 0.0
  %806 = vmatprep.subr.mxu0 0.0
  %807 = vmatpush1.msra.mxu0 0.0
  %808 = vmatprep.subr.mxu0 0.0
  %809 = vmatpush1.msra.mxu0 0.0
  %810 = vmatprep.subr.mxu0 0.0
  %811 = vmatpush1.msra.mxu0 0.0
  %812 = vmatprep.subr.mxu0 0.0
  %813 = vmatpush1.msra.mxu0 0.0
  %814 = vmatprep.subr.mxu0 0.0
  %815 = vmatpush1.msra.mxu0 0.0
  %816 = vmatprep.subr.mxu0 0.0
  %817 = vmatpush1.msra.mxu0 0.0
  %818 = vmatprep.subr.mxu0 0.0
  %819 = vmatpush1.msra.mxu0 0.0
  %820 = vmatprep.subr.mxu0 0.0
  %821 = vmatpush1.msra.mxu0 0.0
  %822 = vmatprep.subr.mxu0 0.0
  %823 = vmatpush1.msra.mxu0 0.0
  %824 = vmatprep.subr.mxu0 0.0
  %825 = vmatpush1.msra.mxu0 0.0
  %826 = vmatprep.subr.mxu0 0.0
  %827 = vmatpush1.msra.mxu0 0.0
  %828 = vmatprep.mubr.f32.mxu0 0.0
  %829 = vmatmul.mubr.f32.gmra.mrb[0].mxu0 %v761
  %v830 = vpop.f32.mrb[0].mxu0
  %v831 = vadd.f32 0.0, %v830
  %v832 = vpop.f32.mrb[0].mxu0
  %833 = vdwg.mxu0
  %v834 = vadd.f32 %v763, %v831
  %v835 = vtanh.pop %v834
  %v836 = vxor.u32 %v834, 2147483648
  %v837 = vmul.f32 %v836, 1.442695
  %v838 = vpow.pop %v837
  %v839 = vadd.f32 %v838, 1.0
  %v840 = vrcp.pop %v839
  %v841 = vmul.f32 1.0, %v840
  %v842 = vsel %vm203, %v835, %v841
  %843 = vrot.lane.b32.xlu0 %v842, 96
  %v844 = vpop.permute.xlu0 %843
  %845 = vrot.lane.b32.xlu0 %v842, 64
  %v846 = vpop.permute.xlu0 %845
  %847 = vrot.lane.b32.xlu0 %v842, 32
  %v848 = vpop.permute.xlu0 %847
  %v849 = vmul.f32 %v844, %v759
  %v850 = vmul.f32 %v842, %v846
  %v851 = vadd.f32 %v849, %v850
  %v852 = vsel %vm204, %v851, 0.0
  %v853 = vtanh.pop %v852
  %v854 = vmul.f32 %v848, %v853
  %s855 = scalar_lea.vmem [#allocation2], 56
  %v856 = vld [vmem:[%s855] sm:$0xff]
  %857 = vmatprep.subr.mxu0 0.0
  %858 = vmatpush1.msra.mxu0 %v26
  %859 = vmatprep.subr.mxu0 0.0
  %860 = vmatpush1.msra.mxu0 %v27
  %861 = vmatprep.subr.mxu0 0.0
  %862 = vmatpush1.msra.mxu0 %v28
  %863 = vmatprep.subr.mxu0 0.0
  %864 = vmatpush1.msra.mxu0 %v29
  %865 = vmatprep.subr.mxu0 0.0
  %866 = vmatpush1.msra.mxu0 %v30
  %867 = vmatprep.subr.mxu0 0.0
  %868 = vmatpush1.msra.mxu0 %v31
  %869 = vmatprep.subr.mxu0 0.0
  %870 = vmatpush1.msra.mxu0 %v32
  %871 = vmatprep.subr.mxu0 0.0
  %872 = vmatpush1.msra.mxu0 %v33
  %873 = vmatprep.subr.mxu0 0.0
  %874 = vmatpush1.msra.mxu0 %v34
  %875 = vmatprep.subr.mxu0 0.0
  %876 = vmatpush1.msra.mxu0 %v35
  %877 = vmatprep.subr.mxu0 0.0
  %878 = vmatpush1.msra.mxu0 %v36
  %879 = vmatprep.subr.mxu0 0.0
  %880 = vmatpush1.msra.mxu0 %v37
  %881 = vmatprep.subr.mxu0 0.0
  %882 = vmatpush1.msra.mxu0 %v38
  %883 = vmatprep.subr.mxu0 0.0
  %884 = vmatpush1.msra.mxu0 %v39
  %885 = vmatprep.subr.mxu0 0.0
  %886 = vmatpush1.msra.mxu0 %v40
  %887 = vmatprep.subr.mxu0 0.0
  %888 = vmatpush1.msra.mxu0 %v41
  %889 = vmatprep.subr.mxu0 0.0
  %890 = vmatpush1.msra.mxu0 0.0
  %891 = vmatprep.subr.mxu0 0.0
  %892 = vmatpush1.msra.mxu0 0.0
  %893 = vmatprep.subr.mxu0 0.0
  %894 = vmatpush1.msra.mxu0 0.0
  %895 = vmatprep.subr.mxu0 0.0
  %896 = vmatpush1.msra.mxu0 0.0
  %897 = vmatprep.subr.mxu0 0.0
  %898 = vmatpush1.msra.mxu0 0.0
  %899 = vmatprep.subr.mxu0 0.0
  %900 = vmatpush1.msra.mxu0 0.0
  %901 = vmatprep.subr.mxu0 0.0
  %902 = vmatpush1.msra.mxu0 0.0
  %903 = vmatprep.subr.mxu0 0.0
  %904 = vmatpush1.msra.mxu0 0.0
  %905 = vmatprep.subr.mxu0 0.0
  %906 = vmatpush1.msra.mxu0 0.0
  %907 = vmatprep.subr.mxu0 0.0
  %908 = vmatpush1.msra.mxu0 0.0
  %909 = vmatprep.subr.mxu0 0.0
  %910 = vmatpush1.msra.mxu0 0.0
  %911 = vmatprep.subr.mxu0 0.0
  %912 = vmatpush1.msra.mxu0 0.0
  %913 = vmatprep.subr.mxu0 0.0
  %914 = vmatpush1.msra.mxu0 0.0
  %915 = vmatprep.subr.mxu0 0.0
  %916 = vmatpush1.msra.mxu0 0.0
  %917 = vmatprep.subr.mxu0 0.0
  %918 = vmatpush1.msra.mxu0 0.0
  %919 = vmatprep.subr.mxu0 0.0
  %920 = vmatpush1.msra.mxu0 0.0
  %921 = vmatprep.mubr.f32.mxu0 0.0
  %922 = vmatmul.mubr.f32.gmra.mrb[0].mxu0 %v854
  %v923 = vpop.f32.mrb[0].mxu0
  %v924 = vadd.f32 0.0, %v923
  %v925 = vpop.f32.mrb[0].mxu0
  %926 = vdwg.mxu0
  %v927 = vadd.f32 %v856, %v924
  %v928 = vtanh.pop %v927
  %v929 = vxor.u32 %v927, 2147483648
  %v930 = vmul.f32 %v929, 1.442695
  %v931 = vpow.pop %v930
  %v932 = vadd.f32 %v931, 1.0
  %v933 = vrcp.pop %v932
  %v934 = vmul.f32 1.0, %v933
  %v935 = vsel %vm203, %v928, %v934
  %936 = vrot.lane.b32.xlu0 %v935, 96
  %v937 = vpop.permute.xlu0 %936
  %938 = vrot.lane.b32.xlu0 %v935, 64
  %v939 = vpop.permute.xlu0 %938
  %940 = vrot.lane.b32.xlu0 %v935, 32
  %v941 = vpop.permute.xlu0 %940
  %v942 = vmul.f32 %v937, %v852
  %v943 = vmul.f32 %v935, %v939
  %v944 = vadd.f32 %v942, %v943
  %v945 = vsel %vm204, %v944, 0.0
  %v946 = vtanh.pop %v945
  %v947 = vmul.f32 %v941, %v946
  %v948 = vld [vmem:[%s4] sm:$0xff]
  %v949 = vld [vmem:[%s4 + $0x8] sm:$0xff]
  %v950 = vld [vmem:[%s4 + $0x10] sm:$0xff]
  %v951 = vld [vmem:[%s4 + $0x18] sm:$0xff]
  %v952 = vld [vmem:[%s4 + $0x20] sm:$0xff]
  %v953 = vld [vmem:[%s4 + $0x28] sm:$0xff]
  %v954 = vld [vmem:[%s4 + $0x30] sm:$0xff]
  %v955 = vld [vmem:[%s4 + $0x38] sm:$0xff]
  %v956 = vld [vmem:[%s4 + $0x40] sm:$0xff]
  %v957 = vld [vmem:[%s4 + $0x48] sm:$0xff]
  %v958 = vld [vmem:[%s4 + $0x50] sm:$0xff]
  %v959 = vld [vmem:[%s4 + $0x58] sm:$0xff]
  %v960 = vld [vmem:[%s4 + $0x60] sm:$0xff]
  %v961 = vld [vmem:[%s4 + $0x68] sm:$0xff]
  %v962 = vld [vmem:[%s4 + $0x70] sm:$0xff]
  %v963 = vld [vmem:[%s4 + $0x78] sm:$0xff]
  %v964 = vld [vmem:[#allocation3] sm:$0x1]
  %v966 = vlaneseq
  %v967 = vshrl.u32 %v966, 7
  %v968 = vsub.s32 0, %v967
  %v969 = vrot.slane %v964, %v968
  %971 = vmatprep.subr.mxu0 0.0
  %972 = vmatpush1.msra.mxu0 %v948
  %973 = vmatprep.subr.mxu0 0.0
  %974 = vmatpush1.msra.mxu0 %v949
  %975 = vmatprep.subr.mxu0 0.0
  %976 = vmatpush1.msra.mxu0 %v950
  %977 = vmatprep.subr.mxu0 0.0
  %978 = vmatpush1.msra.mxu0 %v951
  %979 = vmatprep.subr.mxu0 0.0
  %980 = vmatpush1.msra.mxu0 %v952
  %981 = vmatprep.subr.mxu0 0.0
  %982 = vmatpush1.msra.mxu0 %v953
  %983 = vmatprep.subr.mxu0 0.0
  %984 = vmatpush1.msra.mxu0 %v954
  %985 = vmatprep.subr.mxu0 0.0
  %986 = vmatpush1.msra.mxu0 %v955
  %987 = vmatprep.subr.mxu0 0.0
  %988 = vmatpush1.msra.mxu0 %v956
  %989 = vmatprep.subr.mxu0 0.0
  %990 = vmatpush1.msra.mxu0 %v957
  %991 = vmatprep.subr.mxu0 0.0
  %992 = vmatpush1.msra.mxu0 %v958
  %993 = vmatprep.subr.mxu0 0.0
  %994 = vmatpush1.msra.mxu0 %v959
  %995 = vmatprep.subr.mxu0 0.0
  %996 = vmatpush1.msra.mxu0 %v960
  %997 = vmatprep.subr.mxu0 0.0
  %998 = vmatpush1.msra.mxu0 %v961
  %999 = vmatprep.subr.mxu0 0.0
  %1000 = vmatpush1.msra.mxu0 %v962
  %1001 = vmatprep.subr.mxu0 0.0
  %1002 = vmatpush1.msra.mxu0 %v963
  %1003 = vmatprep.subr.mxu0 0.0
  %1004 = vmatpush1.msra.mxu0 0.0
  %1005 = vmatprep.subr.mxu0 0.0
  %1006 = vmatpush1.msra.mxu0 0.0
  %1007 = vmatprep.subr.mxu0 0.0
  %1008 = vmatpush1.msra.mxu0 0.0
  %1009 = vmatprep.subr.mxu0 0.0
  %1010 = vmatpush1.msra.mxu0 0.0
  %1011 = vmatprep.subr.mxu0 0.0
  %1012 = vmatpush1.msra.mxu0 0.0
  %1013 = vmatprep.subr.mxu0 0.0
  %1014 = vmatpush1.msra.mxu0 0.0
  %1015 = vmatprep.subr.mxu0 0.0
  %1016 = vmatpush1.msra.mxu0 0.0
  %1017 = vmatprep.subr.mxu0 0.0
  %1018 = vmatpush1.msra.mxu0 0.0
  %1019 = vmatprep.subr.mxu0 0.0
  %1020 = vmatpush1.msra.mxu0 0.0
  %1021 = vmatprep.subr.mxu0 0.0
  %1022 = vmatpush1.msra.mxu0 0.0
  %1023 = vmatprep.subr.mxu0 0.0
  %1024 = vmatpush1.msra.mxu0 0.0
  %1025 = vmatprep.subr.mxu0 0.0
  %1026 = vmatpush1.msra.mxu0 0.0
  %1027 = vmatprep.subr.mxu0 0.0
  %1028 = vmatpush1.msra.mxu0 0.0
  %1029 = vmatprep.subr.mxu0 0.0
  %1030 = vmatpush1.msra.mxu0 0.0
  %1031 = vmatprep.subr.mxu0 0.0
  %1032 = vmatpush1.msra.mxu0 0.0
  %1033 = vmatprep.subr.mxu0 0.0
  %1034 = vmatpush1.msra.mxu0 0.0
  %1035 = vmatprep.mubr.f32.mxu0 0.0
  %1036 = vmatmul.mubr.f32.gmra.mrb[0].mxu0 %v947
  %v1037 = vpop.f32.mrb[0].mxu0
  %v1038 = vadd.f32 %v969, %v1037
  %v1039 = vpop.f32.mrb[0].mxu0
  %1040 = vdwg.mxu0
  %vm1041 = vcmask 7168
  %1042 = vst.msk [vmem:[%s6] sm:$0xff] %vm1041, %v1038
  // Predicated region
  $region26: #{tpu_custom_call.1} parent=0 // pred_check
    _
  $region27: #{tpu_custom_call.1} parent=0 // pred_check_branch
    %1044 = sbr.rel (0) target = $region29
  $region28: #{tpu_custom_call.1} parent=0 // pred_region
    _
  $region29: #{tpu_custom_call.1} parent=0 // pred_fallthru
    _
  // Predicated region
  $region30: #{tpu_custom_call.1} parent=0 // pred_check
    _
  $region31: #{tpu_custom_call.1} parent=0 // pred_check_branch
    %1046 = sbr.rel (0) target = $region33
  $region32: #{tpu_custom_call.1} parent=0 // pred_region
    _
  $region33: #{tpu_custom_call.1} parent=0 // pred_fallthru
    _

</llo_original>
